<compile_context>
chip_gen: v6e
topology: v6e:2x2x1
jax: 0.10.0
libtpu: 0.0.40
codegen_flags: <defaults>
</compile_context>

<pallas_src>
import functools

import jax
import jax.numpy as jnp
from jax.experimental import pallas as pl
from jax.experimental.pallas import tpu as pltpu

N_BINS = 15
_LANE = 128
_STAGE1_LOGITS_BUDGET = 8 * 1024 * 1024   # bytes for double-buffered logits blocks
_STAGE1_TN_CAP = 8192                     # max samples per stage-1 tile (lane axis)
_STAGE3_TB_CAP = 8192                     # max samples per stage-3 tile (lane axis)


def _round_up(x, m):
    return ((x + m - 1) // m) * m


def _sublane(dtype):
    # sublane packing tile: 8 for 32-bit, 16 for bf16, 32 for int8/fp8
    return max(8, 32 // jnp.dtype(dtype).itemsize)


def _largest_dividing_tile(total, cap):
    """Largest multiple of 128 that divides `total` and is <= cap."""
    best = _LANE
    t = _LANE
    while t <= min(total, cap):
        if total % t == 0:
            best = t
        t += _LANE
    return best


# ---------------------------------------------------------------------------
# Stage 1 kernel: per-sample confidence + correctness (samples on lanes).
# ---------------------------------------------------------------------------
def _conf_acc_kernel(logits_ref, labels_ref, conf_ref, acc_ref,
                     m_s, s_s, p_s, *, c_total):
    j = pl.program_id(1)                          # class-chunk index (innermost)

    @pl.when(j == 0)
    def _():
        m_s[...] = jnp.full_like(m_s, -jnp.inf)
        s_s[...] = jnp.zeros_like(s_s)
        p_s[...] = jnp.full_like(p_s, c_total)

    x = logits_ref[...].astype(jnp.float32)       # (tc, tn): classes x samples
    tc, tn = x.shape

    m_old = m_s[...]                              # (1, tn)
    m_loc = jnp.max(x, axis=0, keepdims=True)     # chunk max per sample
    m_new = jnp.maximum(m_old, m_loc)
    # Online softmax denominator: rescale running sum, add this chunk.
    s_s[...] = (s_s[...] * jnp.exp(m_old - m_new)
                + jnp.sum(jnp.exp(x - m_new), axis=0, keepdims=True))
    # First argmax within the chunk, as a global class index.
    row = jax.lax.broadcasted_iota(jnp.int32, (tc, tn), 0) + j * tc
    p_loc = jnp.min(jnp.where(x >= m_loc, row, c_total + tc),
                    axis=0, keepdims=True)
    # Earlier chunks win ties -> first-occurrence (torch.max / argmax) semantics.
    p_s[...] = jnp.where(m_loc > m_old, p_loc, p_s[...])
    m_s[...] = m_new

    @pl.when(j == pl.num_programs(1) - 1)
    def _():
        labels = labels_ref[...]                  # (1, tn); -1 marks padded samples
        valid = labels >= 0
        # max softmax prob = exp(max - max) / sum = 1 / sum.  Exact reciprocal:
        # bin membership is boundary-sensitive, so no approx reciprocal here.
        conf_ref[...] = jnp.where(valid, 1.0 / s_s[...], 0.0)
        acc_ref[...] = (p_s[...] == labels).astype(jnp.float32)


# ---------------------------------------------------------------------------
# Stage 3 kernel: binned ECE accumulation + finalize.
# ---------------------------------------------------------------------------
def _binned_ece_kernel(low_ref, up_ref, conf_ref, acc_ref, out_ref,
                       cnt_s, asum_s, csum_s, *, n_valid):
    i = pl.program_id(0)

    @pl.when(i == 0)
    def _():
        cnt_s[...] = jnp.zeros_like(cnt_s)
        asum_s[...] = jnp.zeros_like(asum_s)
        csum_s[...] = jnp.zeros_like(csum_s)

    conf = conf_ref[...]                          # (1, TB)
    acc = acc_ref[...]                            # (1, TB)
    lowers = low_ref[...]                         # (n_bins, 1)
    uppers = up_ref[...]                          # (n_bins, 1)

    # Dense (n_bins, TB) membership mask; padded lanes have conf == 0.0 which
    # is <= every lower edge, so they land in no bin.
    in_bin = jnp.logical_and(conf > lowers, conf <= uppers).astype(jnp.float32)
    cnt_s[...] += jnp.sum(in_bin, axis=1, keepdims=True)
    asum_s[...] += jnp.sum(in_bin * acc, axis=1, keepdims=True)
    csum_s[...] += jnp.sum(in_bin * conf, axis=1, keepdims=True)

    @pl.when(i == pl.num_programs(0) - 1)
    def _():
        cnt = cnt_s[...]
        denom = jnp.maximum(cnt, 1.0)             # guard empty bins
        diff = jnp.abs(csum_s[...] / denom - asum_s[...] / denom)
        prop = cnt * jnp.float32(1.0 / n_valid)
        contrib = jnp.where(cnt > 0.0, diff * prop, 0.0)
        out_ref[...] = jnp.sum(contrib, axis=0, keepdims=True)  # (1, 1)


# ---------------------------------------------------------------------------
# Wrapper.
# ---------------------------------------------------------------------------
def adaptive_ece_loss(logits, labels, n_bins=N_BINS):
    """logits: (N, C) float (any dtype), labels: (N,) int -> (1,) f32 adaptive ECE."""
    n, c = logits.shape
    labels = labels.astype(jnp.int32)
    if not jnp.issubdtype(logits.dtype, jnp.floating):
        logits = logits.astype(jnp.float32)

    itemsize = jnp.dtype(logits.dtype).itemsize
    sub = _sublane(logits.dtype)

    # ----- stage-1 tiling: derive block sizes from C + the VMEM budget -------
    per_col = 2 * _round_up(c, sub) * itemsize    # double-buffered logits bytes per sample
    if per_col * _LANE <= _STAGE1_LOGITS_BUDGET:
        # Whole class axis fits in one block (common case): no C chunking.
        tc, c_pad = c, c
        tn_max = _STAGE1_LOGITS_BUDGET // per_col
    else:
        # Vocab-scale C: chunk the class axis, accumulate softmax stats online.
        tn_max = _LANE
        tc = max(sub, (_STAGE1_LOGITS_BUDGET // (2 * _LANE * itemsize)) // sub * sub)
        c_pad = _round_up(c, tc)
    c_chunks = c_pad // tc

    # One padded sample count shared by stage 1 and stage 3 (no reshapes between).
    tn = min(_round_up(n, _LANE), (tn_max // _LANE) * _LANE, _STAGE1_TN_CAP)
    n_pad = _round_up(n, tn)
    tb = _largest_dividing_tile(n_pad, _STAGE3_TB_CAP)   # stage-3 tile (>= tn)

    # Samples on lanes: logits presented as (C, N).  Pad classes / samples with
    # the dtype's most negative finite value (padded classes never win the max
    # or contribute to the sum; padded samples are masked by the label == -1
    # sentinel inside the kernel).
    pad_val = jnp.finfo(logits.dtype).min
    logits_t = logits.T
    if c_pad > c or n_pad > n:
        logits_t = jnp.pad(logits_t, ((0, c_pad - c), (0, n_pad - n)),
                           constant_values=pad_val)
    labels_row = jnp.pad(labels, (0, n_pad - n), constant_values=-1).reshape(1, n_pad)

    # VMEM estimate (double-buffered blocks + scratch) with ~2x headroom,
    # capped at 32 MiB so it fits every generation's physical VMEM (incl. v7x).
    est = (2 * _round_up(tc, sub) * tn * itemsize   # logits blocks
           + 2 * tn * 4                             # labels blocks
           + 2 * 2 * tn * 4                         # conf/acc output blocks
           + 3 * tn * 4)                            # online-softmax scratch
    vmem_limit = min(32 * 1024 * 1024, max(16 * 1024 * 1024, 2 * est))

    conf_row, acc_row = pl.pallas_call(
        functools.partial(_conf_acc_kernel, c_total=c),
        out_shape=(jax.ShapeDtypeStruct((1, n_pad), jnp.float32),
                   jax.ShapeDtypeStruct((1, n_pad), jnp.float32)),
        grid=(n_pad // tn, c_chunks),
        in_specs=[
            pl.BlockSpec((tc, tn), lambda i, j: (j, i)),   # logits chunk (classes x samples)
            pl.BlockSpec((1, tn), lambda i, j: (0, i)),    # labels (lane-dense row)
        ],
        out_specs=(
            pl.BlockSpec((1, tn), lambda i, j: (0, i)),    # confidences (lane-dense row)
            pl.BlockSpec((1, tn), lambda i, j: (0, i)),    # correctness (lane-dense row)
        ),
        scratch_shapes=[
            pltpu.VMEM((1, tn), jnp.float32),   # running max
            pltpu.VMEM((1, tn), jnp.float32),   # running sum(exp)
            pltpu.VMEM((1, tn), jnp.int32),     # running first-argmax
        ],
        compiler_params=pltpu.CompilerParams(
            dimension_semantics=("parallel", "arbitrary"),
            vmem_limit_bytes=vmem_limit),
    )(logits_t, labels_row)

    # ----- stage 2: adaptive (equal-mass) bin edges ---------------------------
    # TODO(synk): histedges_equalN / np.histogram edge computation (sort +
    # interp) has no clean Pallas equivalent; done with plain jnp here.
    conf_valid = conf_row[0, :n]
    edges = jnp.interp(jnp.linspace(0.0, float(n), n_bins + 1),
                       jnp.arange(n, dtype=jnp.float32),
                       jnp.sort(conf_valid))
    lowers2d = edges[:-1].reshape(n_bins, 1).astype(jnp.float32)
    uppers2d = edges[1:].reshape(n_bins, 1).astype(jnp.float32)

    # ----- stage 3: binned ECE reduction (Pallas, accumulate over N tiles) ----
    ece = pl.pallas_call(
        functools.partial(_binned_ece_kernel, n_valid=n),
        out_shape=jax.ShapeDtypeStruct((1, 1), jnp.float32),
        grid=(n_pad // tb,),
        in_specs=[
            pl.BlockSpec((n_bins, 1), lambda i: (0, 0)),   # bin lowers
            pl.BlockSpec((n_bins, 1), lambda i: (0, 0)),   # bin uppers
            pl.BlockSpec((1, tb), lambda i: (0, i)),       # confidences (lane-dense)
            pl.BlockSpec((1, tb), lambda i: (0, i)),       # correctness  (lane-dense)
        ],
        out_specs=pl.BlockSpec((1, 1), lambda i: (0, 0)),
        scratch_shapes=[pltpu.VMEM((n_bins, 1), jnp.float32)] * 3,
        compiler_params=pltpu.CompilerParams(dimension_semantics=("arbitrary",)),
    )(lowers2d, uppers2d, conf_row, acc_row)

    return ece.reshape(1)


# ---------------------------------------------------------------------------
# Pure-JAX reference mirroring the PyTorch AdaptiveECELoss.forward.
# ---------------------------------------------------------------------------
def _adaptive_ece_reference(logits, labels, n_bins=N_BINS):
    probs = jax.nn.softmax(logits.astype(jnp.float32), axis=1)
    conf = jnp.max(probs, axis=1)
    pred = jnp.argmax(probs, axis=1)
    acc = (pred == labels).astype(jnp.float32)
    n = logits.shape[0]
    edges = jnp.interp(jnp.linspace(0.0, float(n), n_bins + 1),
                       jnp.arange(n, dtype=jnp.float32),
                       jnp.sort(conf))
    ece = jnp.zeros((1,), jnp.float32)
    for b in range(n_bins):
        lo = edges[b]
        hi = edges[b + 1]
        in_bin = jnp.logical_and(conf > lo, conf <= hi).astype(jnp.float32)
        cnt = jnp.sum(in_bin)
        denom = jnp.maximum(cnt, 1.0)
        acc_in = jnp.sum(acc * in_bin) / denom
        conf_in = jnp.sum(conf * in_bin) / denom
        prop = cnt / n
        ece = ece + jnp.where(cnt > 0.0, jnp.abs(conf_in - acc_in) * prop, 0.0)
    return ece


if __name__ == "__main__":
    key = jax.random.PRNGKey(0)
    k_logits, k_labels = jax.random.split(key)

    N, C = 200, 10   # small, deterministic example shapes (batch x classes)
    logits = jax.random.normal(k_logits, (N, C), dtype=jnp.float32) * 2.0
    labels = jax.random.randint(k_labels, (N,), 0, C, dtype=jnp.int32)

    ece = jax.block_until_ready(adaptive_ece_loss(logits, labels))
    ece_ref = jax.block_until_ready(_adaptive_ece_reference(logits, labels))

    assert ece.shape == (1,)
    assert jnp.allclose(ece, ece_ref, atol=1e-4, rtol=1e-4), (ece, ece_ref)
    print("KERNEL_OK")
</pallas_src>

<mosaic_0001>
module attributes {stable_mosaic.version = 11 : i64} {
  func.func @_conf_acc_kernel(%arg0: i32, %arg1: i32, %arg2: memref<10x256xf32, #tpu.memory_space<vmem>>, %arg3: memref<1x256xi32, #tpu.memory_space<vmem>>, %arg4: memref<1x256xf32, #tpu.memory_space<vmem>>, %arg5: memref<1x256xf32, #tpu.memory_space<vmem>>, %arg6: memref<1x256xf32, #tpu.memory_space<vmem>>, %arg7: memref<1x256xf32, #tpu.memory_space<vmem>>, %arg8: memref<1x256xi32, #tpu.memory_space<vmem>>) attributes {dimension_semantics = [#tpu.dimension_semantics<parallel>, #tpu.dimension_semantics<arbitrary>], iteration_bounds = array<i64: 1, 1>, scalar_prefetch = 0 : i64, scratch_operands = 3 : i64, tpu.core_type = #tpu.core_type<tc>, window_params = [{transform_indices = @transform_0, window_bounds = array<i64: 10, 256>}, {transform_indices = @transform_1, window_bounds = array<i64: 1, 256>}, {transform_indices = @transform_2, window_bounds = array<i64: 1, 256>}, {transform_indices = @transform_3, window_bounds = array<i64: 1, 256>}]} {
    %c0_i32 = arith.constant 0 : i32
    %0 = arith.cmpi eq, %arg1, %c0_i32 : i32
    %1 = arith.extui %0 : i1 to i32
    %c0_i32_0 = arith.constant 0 : i32
    %2 = arith.cmpi ne, %1, %c0_i32_0 : i32
    scf.if %2 {
      %cst_18 = arith.constant 0xFF800000 : f32
      %37 = vector.broadcast %cst_18 : f32 to vector<1x256xf32>
      %c0_19 = arith.constant 0 : index
      %c0_20 = arith.constant 0 : index
      %38 = vector.load %arg6[%c0_19, %c0_20] : memref<1x256xf32, #tpu.memory_space<vmem>>, vector<1x256xf32>
      tpu.vector_store %arg6[%c0_19, %c0_20], %37 {strides = array<i32>} : memref<1x256xf32, #tpu.memory_space<vmem>>, vector<1x256xf32>,
      %cst_21 = arith.constant 0.000000e+00 : f32
      %39 = vector.broadcast %cst_21 : f32 to vector<1x256xf32>
      %c0_22 = arith.constant 0 : index
      %c0_23 = arith.constant 0 : index
      %40 = vector.load %arg7[%c0_22, %c0_23] : memref<1x256xf32, #tpu.memory_space<vmem>>, vector<1x256xf32>
      tpu.vector_store %arg7[%c0_22, %c0_23], %39 {strides = array<i32>} : memref<1x256xf32, #tpu.memory_space<vmem>>, vector<1x256xf32>,
      %c10_i32_24 = arith.constant 10 : i32
      %41 = vector.broadcast %c10_i32_24 : i32 to vector<1x256xi32>
      %c0_25 = arith.constant 0 : index
      %c0_26 = arith.constant 0 : index
      %42 = vector.load %arg8[%c0_25, %c0_26] : memref<1x256xi32, #tpu.memory_space<vmem>>, vector<1x256xi32>
      tpu.vector_store %arg8[%c0_25, %c0_26], %41 {strides = array<i32>} : memref<1x256xi32, #tpu.memory_space<vmem>>, vector<1x256xi32>,
    } else {
    }
    %c0 = arith.constant 0 : index
    %c0_1 = arith.constant 0 : index
    %3 = vector.load %arg2[%c0, %c0_1] : memref<10x256xf32, #tpu.memory_space<vmem>>, vector<10x256xf32>
    %c0_2 = arith.constant 0 : index
    %c0_3 = arith.constant 0 : index
    %4 = vector.load %arg6[%c0_2, %c0_3] : memref<1x256xf32, #tpu.memory_space<vmem>>, vector<1x256xf32>
    %cst = arith.constant dense<0xFF800000> : vector<256xf32>
    %5 = vector.multi_reduction <maximumf>, %3, %cst [0] : vector<10x256xf32> to vector<256xf32>
    %6 = vector.shape_cast %5 : vector<256xf32> to vector<1x256xf32>
    %7 = arith.maximumf %4, %6 : vector<1x256xf32>
    %c0_4 = arith.constant 0 : index
    %c0_5 = arith.constant 0 : index
    %8 = vector.load %arg7[%c0_4, %c0_5] : memref<1x256xf32, #tpu.memory_space<vmem>>, vector<1x256xf32>
    %9 = arith.subf %4, %7 : vector<1x256xf32>
    %10 = math.exp %9 : vector<1x256xf32>
    %11 = arith.mulf %8, %10 : vector<1x256xf32>
    %12 = vector.broadcast %7 : vector<1x256xf32> to vector<10x256xf32>
    %13 = arith.subf %3, %12 : vector<10x256xf32>
    %14 = math.exp %13 : vector<10x256xf32>
    %cst_6 = arith.constant dense<0.000000e+00> : vector<256xf32>
    %15 = vector.multi_reduction <add>, %14, %cst_6 [0] : vector<10x256xf32> to vector<256xf32>
    %16 = vector.shape_cast %15 : vector<256xf32> to vector<1x256xf32>
    %17 = arith.addf %11, %16 : vector<1x256xf32>
    %c0_7 = arith.constant 0 : index
    %c0_8 = arith.constant 0 : index
    %18 = vector.load %arg7[%c0_7, %c0_8] : memref<1x256xf32, #tpu.memory_space<vmem>>, vector<1x256xf32>
    tpu.vector_store %arg7[%c0_7, %c0_8], %17 {strides = array<i32>} : memref<1x256xf32, #tpu.memory_space<vmem>>, vector<1x256xf32>,
    %19 = tpu.iota {dimensions = array<i32: 0>} : vector<10x256xi32>
    %c10_i32 = arith.constant 10 : i32
    %20 = arith.muli %arg1, %c10_i32 : i32
    %21 = vector.broadcast %20 : i32 to vector<10x256xi32>
    %22 = arith.addi %19, %21 : vector<10x256xi32>
    %23 = vector.broadcast %6 : vector<1x256xf32> to vector<10x256xf32>
    %24 = arith.cmpf oge, %3, %23 : vector<10x256xf32>
    %c20_i32 = arith.constant 20 : i32
    %25 = vector.broadcast %c20_i32 : i32 to vector<10x256xi32>
    %26 = arith.select %24, %22, %25 : vector<10x256xi1>, vector<10x256xi32>
    %cst_9 = arith.constant dense<2147483647> : vector<256xi32>
    %27 = vector.multi_reduction <minsi>, %26, %cst_9 [0] : vector<10x256xi32> to vector<256xi32>
    %28 = vector.shape_cast %27 : vector<256xi32> to vector<1x256xi32>
    %29 = arith.cmpf ogt, %6, %4 : vector<1x256xf32>
    %c0_10 = arith.constant 0 : index
    %c0_11 = arith.constant 0 : index
    %30 = vector.load %arg8[%c0_10, %c0_11] : memref<1x256xi32, #tpu.memory_space<vmem>>, vector<1x256xi32>
    %31 = arith.select %29, %28, %30 : vector<1x256xi1>, vector<1x256xi32>
    %c0_12 = arith.constant 0 : index
    %c0_13 = arith.constant 0 : index
    %32 = vector.load %arg8[%c0_12, %c0_13] : memref<1x256xi32, #tpu.memory_space<vmem>>, vector<1x256xi32>
    tpu.vector_store %arg8[%c0_12, %c0_13], %31 {strides = array<i32>} : memref<1x256xi32, #tpu.memory_space<vmem>>, vector<1x256xi32>,
    %c0_14 = arith.constant 0 : index
    %c0_15 = arith.constant 0 : index
    %33 = vector.load %arg6[%c0_14, %c0_15] : memref<1x256xf32, #tpu.memory_space<vmem>>, vector<1x256xf32>
    tpu.vector_store %arg6[%c0_14, %c0_15], %7 {strides = array<i32>} : memref<1x256xf32, #tpu.memory_space<vmem>>, vector<1x256xf32>,
    %c0_i32_16 = arith.constant 0 : i32
    %34 = arith.cmpi eq, %arg1, %c0_i32_16 : i32
    %35 = arith.extui %34 : i1 to i32
    %c0_i32_17 = arith.constant 0 : i32
    %36 = arith.cmpi ne, %35, %c0_i32_17 : i32
    scf.if %36 {
      %c0_18 = arith.constant 0 : index
      %c0_19 = arith.constant 0 : index
      %37 = vector.load %arg3[%c0_18, %c0_19] : memref<1x256xi32, #tpu.memory_space<vmem>>, vector<1x256xi32>
      %c0_i32_20 = arith.constant 0 : i32
      %38 = vector.broadcast %c0_i32_20 : i32 to vector<1x256xi32>
      %39 = arith.cmpi sge, %37, %38 : vector<1x256xi32>
      %c0_21 = arith.constant 0 : index
      %c0_22 = arith.constant 0 : index
      %40 = vector.load %arg7[%c0_21, %c0_22] : memref<1x256xf32, #tpu.memory_space<vmem>>, vector<1x256xf32>
      %cst_23 = arith.constant 1.000000e+00 : f32
      %41 = vector.broadcast %cst_23 : f32 to vector<1x256xf32>
      %42 = arith.divf %41, %40 : vector<1x256xf32>
      %cst_24 = arith.constant 0.000000e+00 : f32
      %43 = vector.broadcast %cst_24 : f32 to vector<1x256xf32>
      %44 = arith.select %39, %42, %43 : vector<1x256xi1>, vector<1x256xf32>
      %c0_25 = arith.constant 0 : index
      %c0_26 = arith.constant 0 : index
      %45 = vector.load %arg4[%c0_25, %c0_26] : memref<1x256xf32, #tpu.memory_space<vmem>>, vector<1x256xf32>
      tpu.vector_store %arg4[%c0_25, %c0_26], %44 {strides = array<i32>} : memref<1x256xf32, #tpu.memory_space<vmem>>, vector<1x256xf32>,
      %c0_27 = arith.constant 0 : index
      %c0_28 = arith.constant 0 : index
      %46 = vector.load %arg8[%c0_27, %c0_28] : memref<1x256xi32, #tpu.memory_space<vmem>>, vector<1x256xi32>
      %47 = arith.cmpi eq, %46, %37 : vector<1x256xi32>
      %48 = arith.extui %47 : vector<1x256xi1> to vector<1x256xi32>
      %49 = arith.sitofp %48 : vector<1x256xi32> to vector<1x256xf32>
      %c0_29 = arith.constant 0 : index
      %c0_30 = arith.constant 0 : index
      %50 = vector.load %arg5[%c0_29, %c0_30] : memref<1x256xf32, #tpu.memory_space<vmem>>, vector<1x256xf32>
      tpu.vector_store %arg5[%c0_29, %c0_30], %49 {strides = array<i32>} : memref<1x256xf32, #tpu.memory_space<vmem>>, vector<1x256xf32>,
    } else {
    }
    return
  }
  func.func @transform_0(%arg0: i32, %arg1: i32) -> (i32, i32) {
    %c0_i32 = arith.constant 0 : i32
    return %arg1, %arg0 : i32, i32
  }
  func.func @transform_1(%arg0: i32, %arg1: i32) -> (i32, i32) {
    %c0_i32 = arith.constant 0 : i32
    %c0_i32_0 = arith.constant 0 : i32
    return %c0_i32, %arg0 : i32, i32
  }
  func.func @transform_2(%arg0: i32, %arg1: i32) -> (i32, i32) {
    %c0_i32 = arith.constant 0 : i32
    %c0_i32_0 = arith.constant 0 : i32
    return %c0_i32, %arg0 : i32, i32
  }
  func.func @transform_3(%arg0: i32, %arg1: i32) -> (i32, i32) {
    %c0_i32 = arith.constant 0 : i32
    %c0_i32_0 = arith.constant 0 : i32
    return %c0_i32, %arg0 : i32, i32
  }
}

</mosaic_0001>

<llo_original>
// kernel: tpu_custom_call.1
$region0: #{tpu_custom_call.1}
  #allocation0 [shape = 'u32[]', space=smem, size = 0x4, offset = 0x4, fixed_abs, tag = 'smem constant byte address 0x4 - core index']
  #allocation1 [shape = 'u32[144,128]{1,0:T(1,128)}', space=vmem, size = 0x12000, scoped, tag = 'internal scratch']
  #allocation2 [shape = 'f32[1,256]{1,0:T(1,128)}', space=vmem, size = 0x400, scoped, tag = 'scratch operand']
  #allocation3 [shape = 'f32[1,256]{1,0:T(1,128)}', space=vmem, size = 0x400, scoped, tag = 'scratch operand']
  #allocation4 [shape = 's32[1,256]{1,0:T(1,128)}', space=vmem, size = 0x400, scoped, tag = 'scratch operand']
  %s0 = inlined_call_operand.hbm [shape: f32[10,256], index: 0, kind: input, shape index: {}]
  %s1 = inlined_call_operand.hbm [shape: s32[1,256], index: 1, kind: input, shape index: {}]
  %s2 = inlined_call_operand.hbm [shape: f32[1,256], index: 2, kind: output, shape index: {0}]
  %s3 = inlined_call_operand.hbm [shape: f32[1,256], index: 3, kind: output, shape index: {1}]
  %4 = xla_tuple %s2, %s3
  %s5 = sld [smem:[#allocation0]]
  $region42: #{tpu_custom_call.1} parent=0
    _
  %s7 = ssub.s32 1, %s5
  %s8 = scalar_select 0, %s7, %s5
  $region1: #{tpu_custom_call.1} parent=0
    #allocation5 [shape = 'u8[16384]{0}', space=vmem, size = 0x4000, scoped, tag = 'input window, operand 0, single buffered']
    #allocation6 [shape = 's32[1]{0}', space=sflag, size = 0x4, scoped, tag = 'scoped memory for tpu_custom_call.1']
    #allocation7 [shape = 's32[1]{0}', space=sflag, size = 0x4, scoped, tag = 'scoped memory for tpu_custom_call.1']
    #allocation8 [shape = 'u8[1024]{0}', space=vmem, size = 0x400, scoped, tag = 'input window, operand 1, single buffered']
    #allocation9 [shape = 's32[1]{0}', space=sflag, size = 0x4, scoped, tag = 'scoped memory for tpu_custom_call.1']
    #allocation10 [shape = 'u8[1024]{0}', space=vmem, size = 0x400, scoped, tag = 'output window, operand 0, single buffered']
    #allocation11 [shape = 'u8[1024]{0}', space=vmem, size = 0x400, scoped, tag = 'output window, operand 1, single buffered']
    #allocation12 [shape = 's32[1]{0}', space=sflag, size = 0x4, scoped, tag = 'scoped memory for tpu_custom_call.1']
    %9 = vsyncpa [#allocation6], 0
    %10 = vsyncpa [#allocation9], 0
    %11 = vsyncpa [#allocation7], 0
    %12 = vsyncpa [#allocation12], 0
    // Predicated region
    $region2: #{tpu_custom_call.1} parent=1 // pred_check
      _
    $region3: #{tpu_custom_call.1} parent=1 // pred_check_branch
      %14 = sbr.rel (0) target = $region5
    $region4: #{tpu_custom_call.1} parent=1 // pred_region
      %s16 = ssub.s32 512, 512
      %17 = vsyncadd [#allocation6], %s16
      %s18 = sshll.u32 [#allocation5], 4
      %s19 = int_to_ptr.vmem [resolvable:$true] %s18
      %24 = dma.hbm_to_vmem [thread:$0]  %s0, 512, %s19, [#allocation6], 256, 256, 16
    $region5: #{tpu_custom_call.1} parent=1 // pred_fallthru
      _
    // Predicated region
    $region6: #{tpu_custom_call.1} parent=1 // pred_check
      _
    $region7: #{tpu_custom_call.1} parent=1 // pred_check_branch
      %26 = sbr.rel (0) target = $region9
    $region8: #{tpu_custom_call.1} parent=1 // pred_region
      %s28 = ssub.s32 32, 32
      %29 = vsyncadd [#allocation9], %s28
      %s31 = sshll.u32 [#allocation8], 4
      %s32 = int_to_ptr.vmem [resolvable:$true] %s31
      %34 = dma.hbm_to_vmem [thread:$0]  %s1, 32, %s32, [#allocation9]
    $region9: #{tpu_custom_call.1} parent=1 // pred_fallthru
      _
    // Predicated region
    $region10: #{tpu_custom_call.1} parent=1 // pred_check
      _
    $region11: #{tpu_custom_call.1} parent=1 // pred_check_branch
      %36 = sbr.rel (0) target = $region13
    $region12: #{tpu_custom_call.1} parent=1 // pred_region
      %37 = dma.done [#allocation6], 512
    $region13: #{tpu_custom_call.1} parent=1 // pred_fallthru
      _
    // Predicated region
    $region14: #{tpu_custom_call.1} parent=1 // pred_check
      _
    $region15: #{tpu_custom_call.1} parent=1 // pred_check_branch
      %39 = sbr.rel (0) target = $region17
    $region16: #{tpu_custom_call.1} parent=1 // pred_region
      %40 = dma.done [#allocation9], 32
    $region17: #{tpu_custom_call.1} parent=1 // pred_fallthru
      _
    %p41 = scmp.eq.s32.totalorder 0, 0
    // Predicated region
    $region18: #{tpu_custom_call.1} parent=1 // pred_check
      %p42 = pneg %p41
    $region19: #{tpu_custom_call.1} parent=1 // pred_check_branch
      %44 = sbr.rel (%p42) target = $region21
    $region20: #{tpu_custom_call.1} parent=1 // pred_region
      %v45 = vlaneseq
      %vm46 = vcmp.ge.s32.totalorder %v45, 0
      %vm47 = vcmp.lt.s32.totalorder %v45, 256
      %vm48 = vmand %vm46, %vm47
      %49 = vst.msk [vmem:[#allocation2] sm:$0x3] %vm48, -inf
      %50 = vst.msk [vmem:[#allocation3] sm:$0x3] %vm48, 0.0
      %51 = vst.msk [vmem:[#allocation4] sm:$0x3] %vm48, 10
    $region21: #{tpu_custom_call.1} parent=1 // pred_fallthru
      _
    %v52 = vld [vmem:[#allocation5] sm:$0xff]
    %v53 = vld [vmem:[#allocation5 + $0x8] sm:$0xff]
    %v54 = vld [vmem:[#allocation5 + $0x10] sm:$0x3]
    %v55 = vld [vmem:[#allocation5 + $0x18] sm:$0x3]
    %v56 = vld [vmem:[#allocation2] sm:$0x3]
    %vm57 = vcmask 1041408
    %v58 = vsel %vm57, %v54, -inf
    %v59 = vmax.f32 %v52, %v58
    %v60 = vrot.slane %v59, 4
    %v61 = vmax.f32 %v59, %v60
    %v62 = vrot.slane %v61, 2
    %v63 = vmax.f32 %v61, %v62
    %v64 = vrot.slane %v63, 1
    %v65 = vmax.f32 %v63, %v64
    %v66 = vsel %vm57, %v55, -inf
    %v67 = vmax.f32 %v53, %v66
    %v68 = vrot.slane %v67, 4
    %v69 = vmax.f32 %v67, %v68
    %v70 = vrot.slane %v69, 2
    %v71 = vmax.f32 %v69, %v70
    %v72 = vrot.slane %v71, 1
    %v73 = vmax.f32 %v71, %v72
    %v76 = vcombine.low %v65, %v73
    %v78 = vunpack.c.l.s4 1966171168
    %v79 = vunpack.c.0.s8 %v78
    %v80 = vlaneseq
    %v81 = vshrl.u32 %v80, 7
    %v82 = vsub.s32 %v79, %v81
    %v83 = vrot.slane %v76, %v82
    %v85 = vunpack.c.l.s4 1966171168
    %v86 = vunpack.c.0.s8 %v85
    %v87 = vlaneseq
    %v88 = vshrl.u32 %v87, 7
    %v89 = vsub.s32 %v86, %v88
    %v90 = vrot.slane %v83, %v89
    %v92 = vmax.f32 %v56, %v90
    %v93 = vld [vmem:[#allocation3] sm:$0x3]
    %v94 = vsub.f32 %v56, %v92
    %v95 = vmul.f32 %v94, 1.442695
    %v96 = vpow.pop %v95
    %v97 = vmul.f32 %v93, %v96
    %v99 = vlaneseq
    %v100 = vshrl.u32 %v99, 7
    %v101 = vsub.s32 0, %v100
    %v102 = vrot.slane %v92, %v101
    %v103 = vlaneseq
    %v104 = vshrl.u32 %v103, 7
    %v105 = vsub.s32 1, %v104
    %v106 = vrot.slane %v92, %v105
    %v109 = vsub.f32 %v52, %v102
    %v110 = vsub.f32 %v53, %v106
    %v111 = vsub.f32 %v54, %v102
    %v112 = vsub.f32 %v55, %v106
    %v113 = vmul.f32 %v109, 1.442695
    %v114 = vpow.pop %v113
    %v115 = vmul.f32 %v110, 1.442695
    %v116 = vpow.pop %v115
    %v117 = vmul.f32 %v111, 1.442695
    %v118 = vpow.pop %v117
    %v119 = vmul.f32 %v112, 1.442695
    %v120 = vpow.pop %v119
    %v121 = vsel %vm57, %v118, 0.0
    %v122 = vadd.f32 %v114, %v121
    %v123 = vrot.slane %v122, 4
    %v124 = vadd.f32 %v122, %v123
    %v125 = vrot.slane %v124, 2
    %v126 = vadd.f32 %v124, %v125
    %v127 = vrot.slane %v126, 1
    %v128 = vadd.f32 %v126, %v127
    %v129 = vsel %vm57, %v120, 0.0
    %v130 = vadd.f32 %v116, %v129
    %v131 = vrot.slane %v130, 4
    %v132 = vadd.f32 %v130, %v131
    %v133 = vrot.slane %v132, 2
    %v134 = vadd.f32 %v132, %v133
    %v135 = vrot.slane %v134, 1
    %v136 = vadd.f32 %v134, %v135
    %v139 = vcombine.low %v128, %v136
    %v141 = vunpack.c.l.s4 1966171168
    %v142 = vunpack.c.0.s8 %v141
    %v143 = vlaneseq
    %v144 = vshrl.u32 %v143, 7
    %v145 = vsub.s32 %v142, %v144
    %v146 = vrot.slane %v139, %v145
    %v148 = vunpack.c.l.s4 1966171168
    %v149 = vunpack.c.0.s8 %v148
    %v150 = vlaneseq
    %v151 = vshrl.u32 %v150, 7
    %v152 = vsub.s32 %v149, %v151
    %v153 = vrot.slane %v146, %v152
    %v155 = vadd.f32 %v97, %v153
    %v156 = vlaneseq
    %vm157 = vcmp.ge.s32.totalorder %v156, 0
    %vm158 = vcmp.lt.s32.totalorder %v156, 256
    %vm159 = vmand %vm157, %vm158
    %160 = vst.msk [vmem:[#allocation3] sm:$0x3] %vm159, %v155
    %v161 = vlaneseq
    %v162 = vshrl.u32 %v161, 7
    %v163 = vadd.s32 %v162, 8
    %s164 = smul.u32 0, 10
    %v165 = vstv %s164
    %v166 = vadd.s32 %v162, %v165
    %v167 = vadd.s32 %v163, %v165
    %vm168 = vcmp.ge.f32.partialorder %v52, %v65
    %vm169 = vcmp.ge.f32.partialorder %v53, %v73
    %vm170 = vcmp.ge.f32.partialorder %v54, %v65
    %vm171 = vcmp.ge.f32.partialorder %v55, %v73
    %v172 = vsel %vm168, %v166, 20
    %v173 = vsel %vm169, %v166, 20
    %v174 = vsel %vm170, %v167, 20
    %v175 = vsel %vm171, %v167, 20
    %v176 = vsel %vm57, %v174, 2147483647
    %vm177 = vcmp.lt.s32.totalorder %v172, %v176
    %v178 = vsel %vm177, %v172, %v176
    %v179 = vrot.slane %v178, 4
    %vm180 = vcmp.lt.s32.totalorder %v178, %v179
    %v181 = vsel %vm180, %v178, %v179
    %v182 = vrot.slane %v181, 2
    %vm183 = vcmp.lt.s32.totalorder %v181, %v182
    %v184 = vsel %vm183, %v181, %v182
    %v185 = vrot.slane %v184, 1
    %vm186 = vcmp.lt.s32.totalorder %v184, %v185
    %v187 = vsel %vm186, %v184, %v185
    %v188 = vsel %vm57, %v175, 2147483647
    %vm189 = vcmp.lt.s32.totalorder %v173, %v188
    %v190 = vsel %vm189, %v173, %v188
    %v191 = vrot.slane %v190, 4
    %vm192 = vcmp.lt.s32.totalorder %v190, %v191
    %v193 = vsel %vm192, %v190, %v191
    %v194 = vrot.slane %v193, 2
    %vm195 = vcmp.lt.s32.totalorder %v193, %v194
    %v196 = vsel %vm195, %v193, %v194
    %v197 = vrot.slane %v196, 1
    %vm198 = vcmp.lt.s32.totalorder %v196, %v197
    %v199 = vsel %vm198, %v196, %v197
    %v201 = vlaneseq
    %v202 = vshrl.u32 %v201, 7
    %v203 = vsub.s32 0, %v202
    %v204 = vrot.slane %v56, %v203
    %v205 = vlaneseq
    %v206 = vshrl.u32 %v205, 7
    %v207 = vsub.s32 1, %v206
    %v208 = vrot.slane %v56, %v207
    %vm211 = vcmp.gt.f32.partialorder %v65, %v204
    %vm212 = vcmp.gt.f32.partialorder %v73, %v208
    %v213 = vld [vmem:[#allocation4] sm:$0x3]
    %v214 = vlaneseq
    %v215 = vshrl.u32 %v214, 7
    %v216 = vsub.s32 0, %v215
    %v217 = vrot.slane %v213, %v216
    %v218 = vlaneseq
    %v219 = vshrl.u32 %v218, 7
    %v220 = vsub.s32 1, %v219
    %v221 = vrot.slane %v213, %v220
    %v222 = vsel %vm211, %v187, %v217
    %v223 = vsel %vm212, %v199, %v221
    %v224 = vcombine.low %v222, %v223
    %v226 = vunpack.c.l.s4 1966171168
    %v227 = vunpack.c.0.s8 %v226
    %v228 = vlaneseq
    %v229 = vshrl.u32 %v228, 7
    %v230 = vsub.s32 %v227, %v229
    %v231 = vrot.slane %v224, %v230
    %v233 = vunpack.c.l.s4 1966171168
    %v234 = vunpack.c.0.s8 %v233
    %v235 = vlaneseq
    %v236 = vshrl.u32 %v235, 7
    %v237 = vsub.s32 %v234, %v236
    %v238 = vrot.slane %v231, %v237
    %239 = vst.msk [vmem:[#allocation4] sm:$0x3] %vm159, %v238
    %240 = vst.msk [vmem:[#allocation2] sm:$0x3] %vm159, %v92
    // Predicated region
    $region22: #{tpu_custom_call.1} parent=1 // pred_check
      %p241 = pneg %p41
    $region23: #{tpu_custom_call.1} parent=1 // pred_check_branch
      %243 = sbr.rel (%p241) target = $region25
    $region24: #{tpu_custom_call.1} parent=1 // pred_region
      %v244 = vld [vmem:[#allocation8] sm:$0x3]
      %vm245 = vcmp.ge.s32.totalorder %v244, 0
      %v246 = vld [vmem:[#allocation3] sm:$0x3]
      %v247 = vrcp.pop %v246
      %v248 = vmul.f32 1.0, %v247
      %v249 = vsel %vm245, %v248, 0.0
      %250 = vst.msk [vmem:[#allocation10] sm:$0x3] %vm159, %v249
      %v251 = vld [vmem:[#allocation4] sm:$0x3]
      %vm252 = vcmp.eq.s32.totalorder %v251, %v244
      %v253 = vsel %vm252, 1, 0
      %v254 = vcvt.s32.f32 %v253
      %255 = vst.msk [vmem:[#allocation11] sm:$0x3] %vm159, %v254
    $region25: #{tpu_custom_call.1} parent=1 // pred_fallthru
      _
    // Predicated region
    $region26: #{tpu_custom_call.1} parent=1 // pred_check
      _
    $region27: #{tpu_custom_call.1} parent=1 // pred_check_branch
      %257 = sbr.rel (0) target = $region29
    $region28: #{tpu_custom_call.1} parent=1 // pred_region
      %s259 = ssub.s32 32, 32
      %260 = vsyncadd [#allocation7], %s259
      %s262 = sshll.u32 [#allocation10], 4
      %s263 = int_to_ptr.vmem [resolvable:$true] %s262
      %265 = dma.vmem_to_hbm [thread:$0]  %s263, 32, %s2, [#allocation7]
    $region29: #{tpu_custom_call.1} parent=1 // pred_fallthru
      _
    // Predicated region
    $region30: #{tpu_custom_call.1} parent=1 // pred_check
      _
    $region31: #{tpu_custom_call.1} parent=1 // pred_check_branch
      %267 = sbr.rel (0) target = $region33
    $region32: #{tpu_custom_call.1} parent=1 // pred_region
      %s269 = ssub.s32 32, 32
      %270 = vsyncadd [#allocation12], %s269
      %s272 = sshll.u32 [#allocation11], 4
      %s273 = int_to_ptr.vmem [resolvable:$true] %s272
      %275 = dma.vmem_to_hbm [thread:$0]  %s273, 32, %s3, [#allocation12]
    $region33: #{tpu_custom_call.1} parent=1 // pred_fallthru
      _
    // Predicated region
    $region34: #{tpu_custom_call.1} parent=1 // pred_check
      _
    $region35: #{tpu_custom_call.1} parent=1 // pred_check_branch
      %277 = sbr.rel (0) target = $region37
    $region36: #{tpu_custom_call.1} parent=1 // pred_region
      %278 = dma.done [#allocation7], 32
    $region37: #{tpu_custom_call.1} parent=1 // pred_fallthru
      _
    // Predicated region
    $region38: #{tpu_custom_call.1} parent=1 // pred_check
      _
    $region39: #{tpu_custom_call.1} parent=1 // pred_check_branch
      %280 = sbr.rel (0) target = $region41
    $region40: #{tpu_custom_call.1} parent=1 // pred_region
      %281 = dma.done [#allocation12], 32
    $region41: #{tpu_custom_call.1} parent=1 // pred_fallthru
      _
    %282 = vsyncpa [#allocation6], 1
    %283 = vsyncpa [#allocation9], 1
    %284 = vsyncpa [#allocation7], 1
    %285 = vsyncpa [#allocation12], 1

</llo_original>
